<compile_context>
chip_gen: v7x
topology: tpu7x:2x2x1
jax: 0.10.0
libtpu: 0.0.40
codegen_flags: <defaults>
</compile_context>

<pallas_src>
import math

import jax
import jax.numpy as jnp
from jax import lax
from jax.experimental import pallas as pl
from jax.experimental.pallas import tpu as pltpu

NEG_FILL = -9e15  # matches torch's -9000000000000000.0 fill


def _round_up(x, m):
    return ((x + m - 1) // m) * m


def _vmem_limit_bytes():
    """Generation-aware scoped-VMEM budget (~96 MiB v5e/v6e, ~48 MiB v7x)."""
    cap = 64 * 1024 * 1024  # conservative fallback == v7x physical VMEM / TC
    try:
        cap = int(pltpu.get_tpu_info().vmem_capacity_bytes)
    except Exception:
        pass
    return int(min(cap * 3 // 4, 100 * 1024 * 1024))


def _pick_tiles(n, row_tile, key_tile):
    """Return (tq, tk, padded_N) satisfying Mosaic's (8,128) block rules."""
    row_tile = max(128, _round_up(row_tile, 128))
    key_tile = max(row_tile, _round_up(key_tile, row_tile))  # tk % tq == 0
    n8 = _round_up(max(n, 8), 8)
    if n8 <= row_tile:
        tq = tk = np_ = n8                 # single block in both directions
    elif n8 <= key_tile:
        tq = row_tile
        np_ = _round_up(n, tq)
        tk = np_                           # single key block per row tile
    else:
        tq = row_tile
        tk = key_tile
        np_ = _round_up(n, tk)             # tk multiple of tq -> np_ % tq == 0
    return tq, tk, np_


# ----------------------------- Kernel A: projection -------------------------
def _proj_kernel(h_ref, w_ref, a1_ref, a2_ref, wh_ref, wh1_ref, wh2_ref):
    # Wh = h @ W on the MXU (bf16 operands pre-cast in the wrapper, f32 acc).
    wh = jnp.dot(h_ref[...], w_ref[...], preferred_element_type=jnp.float32)
    # Wh1 = Wh @ a1^T -> (tq, 1)   (native orientation)
    wh1_ref[...] = lax.dot_general(
        wh, a1_ref[...], (((1,), (1,)), ((), ())),
        preferred_element_type=jnp.float32)
    # Wh2 = a2 @ Wh^T -> (1, tq)   (native row orientation: no XLU transpose)
    wh2_ref[...] = lax.dot_general(
        a2_ref[...], wh, (((1,), (1,)), ((), ())),
        preferred_element_type=jnp.float32)
    # Wh is consumed again by the attention matmul -> keep it in bf16.
    wh_ref[...] = wh.astype(jnp.bfloat16)


# ---------------- Kernel B: row x key tiled attention (online softmax) ------
def _make_attn_kernel(tk):
    def kernel(mask_ref, wh1_ref, wh2_ref, wh_ref, o_ref, m_sc, l_sc, acc_sc):
        kv = pl.program_id(1)

        @pl.when(kv == 0)
        def _():
            m_sc[...] = jnp.full_like(m_sc, -jnp.inf)
            l_sc[...] = jnp.zeros_like(l_sc)
            acc_sc[...] = jnp.zeros_like(acc_sc)

        # e = ReLU(Wh1 + Wh2) for this (tq, tk) block. f32 elementwise (v5e-safe).
        e = jnp.maximum(wh1_ref[...] + wh2_ref[...], 0.0)
        # Adjacency select done in-kernel on the VPU from the int8 mask stream.
        logits = jnp.where(mask_ref[...] > 0, e, NEG_FILL)

        # Online softmax update (running max / sum / accumulator).
        m_prev = m_sc[...]
        m_new = jnp.maximum(m_prev, jnp.max(logits, axis=1, keepdims=True))
        alpha = jnp.exp(m_prev - m_new)
        p = jnp.exp(logits - m_new)
        l_sc[...] = alpha * l_sc[...] + jnp.sum(p, axis=1, keepdims=True)

        # (tk, Fp) key block of the VMEM-resident bf16 Wh (loaded once total).
        k0 = pl.multiple_of(kv * tk, tk)
        wh_blk = wh_ref[pl.ds(k0, tk), :]
        # TODO(synk): attention dropout (training mode) would scale `p` here.
        acc_sc[...] = alpha * acc_sc[...] + jnp.dot(
            p.astype(jnp.bfloat16), wh_blk, preferred_element_type=jnp.float32)
        m_sc[...] = m_new

        @pl.when(kv == pl.num_programs(1) - 1)
        def _():
            h_prime = acc_sc[...] * pl.reciprocal(l_sc[...], approx=True)  # EUP
            # concat=True -> ELU (alpha=1)
            o_ref[...] = jnp.where(h_prime > 0, h_prime,
                                   jnp.expm1(h_prime)).astype(o_ref.dtype)

    return kernel


def make_adj_mask(adj):
    """int8 adjacency mask (1 = edge). Compute once, share across heads/layers."""
    return (adj > 0).astype(jnp.int8)


def gat_layer(h, adj, W, a, *, adj_mask=None, row_tile=256, key_tile=2048):
    """GraphAttentionLayer forward (concat=True, eval mode).

    h: (N, Fin) f32, adj: (N, N), W: (Fin, Fout), a: (2*Fout, 1).
    adj_mask: optional precomputed int8 mask from make_adj_mask(adj) — passing
    it amortizes the O(N^2) mask conversion across GAT heads/layers.
    """
    N, Fin = h.shape
    Fout = W.shape[1]
    Fp = _round_up(Fout, 128)                 # lane-dense padded feature dim

    if adj_mask is None:
        adj_mask = make_adj_mask(adj)
    adj_mask = adj_mask.astype(jnp.int8)

    tq, tk, Np = _pick_tiles(N, row_tile, key_tile)
    vmem_limit = _vmem_limit_bytes()

    # Parameters padded to Fp lanes; padded Wh columns are zero end-to-end.
    W_p = jnp.zeros((Fin, Fp), jnp.bfloat16).at[:, :Fout].set(W.astype(jnp.bfloat16))
    a1 = jnp.zeros((1, Fp), jnp.float32).at[0, :Fout].set(a[:Fout, 0].astype(jnp.float32))
    a2 = jnp.zeros((1, Fp), jnp.float32).at[0, :Fout].set(a[Fout:, 0].astype(jnp.float32))

    # h pre-cast to bf16 (halves its HBM read); rows zero-padded to Np.
    h_bf = h.astype(jnp.bfloat16)
    if Np != N:
        h_bf = jnp.zeros((Np, Fin), jnp.bfloat16).at[:N].set(h_bf)
        mask_p = jnp.zeros((Np, Np), jnp.int8).at[:N, :N].set(adj_mask)
    else:
        mask_p = adj_mask

    # ---- Kernel A: row-tiled projection -------------------------------------
    wh, wh1, wh2 = pl.pallas_call(
        _proj_kernel,
        out_shape=(jax.ShapeDtypeStruct((Np, Fp), jnp.bfloat16),
                   jax.ShapeDtypeStruct((Np, 1), jnp.float32),
                   jax.ShapeDtypeStruct((1, Np), jnp.float32)),
        grid=(Np // tq,),
        in_specs=[
            pl.BlockSpec((tq, Fin), lambda i: (i, 0)),   # h rows (streamed)
            pl.BlockSpec((Fin, Fp), lambda i: (0, 0)),   # W (resident)
            pl.BlockSpec((1, Fp), lambda i: (0, 0)),     # a1 (resident)
            pl.BlockSpec((1, Fp), lambda i: (0, 0)),     # a2 (resident)
        ],
        out_specs=(pl.BlockSpec((tq, Fp), lambda i: (i, 0)),
                   pl.BlockSpec((tq, 1), lambda i: (i, 0)),
                   pl.BlockSpec((1, tq), lambda i: (0, i))),
        compiler_params=pltpu.CompilerParams(
            dimension_semantics=("parallel",),
            vmem_limit_bytes=vmem_limit),
    )(h_bf, W_p, a1, a2)

    # ---- Kernel B: masked online-softmax + aggregation ----------------------
    out_p = pl.pallas_call(
        _make_attn_kernel(tk),
        out_shape=jax.ShapeDtypeStruct((Np, Fp), jnp.float32),
        grid=(Np // tq, Np // tk),
        in_specs=[
            pl.BlockSpec((tq, tk), lambda i, k: (i, k)),   # int8 mask (dominant stream)
            pl.BlockSpec((tq, 1), lambda i, k: (i, 0)),    # Wh1 rows for this tile
            pl.BlockSpec((1, tk), lambda i, k: (0, k)),    # Wh2 key block (tiny)
            pl.BlockSpec((Np, Fp), lambda i, k: (0, 0)),   # Wh bf16 (resident, sliced per k)
        ],
        out_specs=pl.BlockSpec((tq, Fp), lambda i, k: (i, 0)),
        scratch_shapes=[pltpu.VMEM((tq, 1), jnp.float32),   # running max
                        pltpu.VMEM((tq, 1), jnp.float32),   # running sum
                        pltpu.VMEM((tq, Fp), jnp.float32)], # output accumulator
        compiler_params=pltpu.CompilerParams(
            # TODO(synk): pltpu.CORE_PARALLEL on axis 0 for v7x's 2 TensorCores.
            dimension_semantics=("parallel", "arbitrary"),
            vmem_limit_bytes=vmem_limit),
    )(mask_p, wh1, wh2, wh)

    return out_p[:N, :Fout]


# ------------------------------- reference & test ----------------------------
def _xavier_uniform(key, shape, gain):
    fan_in, fan_out = shape[0], shape[1]
    bound = gain * math.sqrt(6.0 / (fan_in + fan_out))
    return jax.random.uniform(key, shape, jnp.float32, minval=-bound, maxval=bound)


def _reference(h, adj, W, a):
    Fout = W.shape[1]
    Wh = h @ W
    Wh1 = Wh @ a[:Fout, :]
    Wh2 = Wh @ a[Fout:, :]
    e = jnp.maximum(Wh1 + Wh2.T, 0.0)
    att = jnp.where(adj > 0, e, NEG_FILL)
    att = jax.nn.softmax(att, axis=1)
    h_prime = att @ Wh
    return jnp.where(h_prime > 0, h_prime, jnp.expm1(h_prime))


def _make_case(key, n, fin, fout):
    k_h, k_adj, k_w, k_a = jax.random.split(key, 4)
    h = jax.random.normal(k_h, (n, fin), jnp.float32)
    adj_logits = jax.random.uniform(k_adj, (n, n), jnp.float32)
    adj = (adj_logits + adj_logits.T > 1.0).astype(jnp.float32)
    adj = jnp.maximum(adj, jnp.eye(n, dtype=jnp.float32))  # self-loops
    W = _xavier_uniform(k_w, (fin, fout), gain=1.414)
    a = _xavier_uniform(k_a, (2 * fout, 1), gain=1.414)
    return h, adj, W, a


if __name__ == "__main__":
    key = jax.random.PRNGKey(0)
    k1, k2 = jax.random.split(key)

    # Case 1: small shapes consistent with the module (single-block path).
    N, Fin, Fout = 8, 16, 32
    h, adj, W, a = _make_case(k1, N, Fin, Fout)
    mask = make_adj_mask(adj)                  # cached mask (amortized pre-pass)
    out = gat_layer(h, adj, W, a, adj_mask=mask)
    jax.block_until_ready(out)
    ref = _reference(h, adj, W, a)
    assert out.shape == (N, Fout)
    # bf16 MXU operands + approx reciprocal -> bf16-level tolerance vs f32 ref.
    assert jnp.allclose(out, ref, atol=3e-2, rtol=3e-2), (
        f"case1 mismatch: max abs err {jnp.max(jnp.abs(out - ref))}")

    # Case 2: exercises row-padding + multi-row-tile grid (N not a tile multiple).
    N2, Fin2, Fout2 = 300, 16, 32
    h2, adj2, W2, a2 = _make_case(k2, N2, Fin2, Fout2)
    out2 = gat_layer(h2, adj2, W2, a2)
    jax.block_until_ready(out2)
    ref2 = _reference(h2, adj2, W2, a2)
    assert out2.shape == (N2, Fout2)
    assert jnp.allclose(out2, ref2, atol=5e-2, rtol=5e-2), (
        f"case2 mismatch: max abs err {jnp.max(jnp.abs(out2 - ref2))}")

    print("KERNEL_OK")
</pallas_src>

<mosaic_0001>
module attributes {stable_mosaic.version = 11 : i64} {
  func.func @_proj_kernel(%arg0: i32, %arg1: memref<8x16xbf16, #tpu.memory_space<vmem>>, %arg2: memref<16x128xbf16, #tpu.memory_space<vmem>>, %arg3: memref<1x128xf32, #tpu.memory_space<vmem>>, %arg4: memref<1x128xf32, #tpu.memory_space<vmem>>, %arg5: memref<8x128xbf16, #tpu.memory_space<vmem>>, %arg6: memref<8x1xf32, #tpu.memory_space<vmem>>, %arg7: memref<1x8xf32, #tpu.memory_space<vmem>>) attributes {dimension_semantics = [#tpu.dimension_semantics<parallel>], iteration_bounds = array<i64: 1>, scalar_prefetch = 0 : i64, scratch_operands = 0 : i64, tpu.core_type = #tpu.core_type<tc>, window_params = [{transform_indices = @transform_0, window_bounds = array<i64: 8, 16>}, {pipeline_mode = #tpu.pipeline_mode<synchronous>, transform_indices = @transform_1, window_bounds = array<i64: 16, 128>}, {pipeline_mode = #tpu.pipeline_mode<synchronous>, transform_indices = @transform_2, window_bounds = array<i64: 1, 128>}, {pipeline_mode = #tpu.pipeline_mode<synchronous>, transform_indices = @transform_3, window_bounds = array<i64: 1, 128>}, {transform_indices = @transform_4, window_bounds = array<i64: 8, 128>}, {transform_indices = @transform_5, window_bounds = array<i64: 8, 1>}, {transform_indices = @transform_6, window_bounds = array<i64: 1, 8>}]} {
    %c0 = arith.constant 0 : index
    %c0_0 = arith.constant 0 : index
    %0 = vector.load %arg1[%c0, %c0_0] : memref<8x16xbf16, #tpu.memory_space<vmem>>, vector<8x16xbf16>
    %c0_1 = arith.constant 0 : index
    %c0_2 = arith.constant 0 : index
    %1 = vector.load %arg2[%c0_1, %c0_2] : memref<16x128xbf16, #tpu.memory_space<vmem>>, vector<16x128xbf16>
    %cst = arith.constant dense<0.000000e+00> : vector<8x128xf32>
    %2 = tpu.matmul %0, %1, %cst {dimension_numbers = #tpu.dot_dimension_numbers<[1], [0], [0], [1], [0, 0, 1, 1], [], []>} : vector<8x16xbf16>, vector<16x128xbf16>, vector<8x128xf32> -> vector<8x128xf32>
    %c0_3 = arith.constant 0 : index
    %c0_4 = arith.constant 0 : index
    %3 = vector.load %arg3[%c0_3, %c0_4] : memref<1x128xf32, #tpu.memory_space<vmem>>, vector<1x128xf32>
    %cst_5 = arith.constant dense<0.000000e+00> : vector<8x1xf32>
    %4 = tpu.matmul %2, %3, %cst_5 {dimension_numbers = #tpu.dot_dimension_numbers<[1], [1], [0], [0], [0, 0, 1, 0], [], []>} : vector<8x128xf32>, vector<1x128xf32>, vector<8x1xf32> -> vector<8x1xf32>
    %c0_6 = arith.constant 0 : index
    %c0_7 = arith.constant 0 : index
    %5 = vector.load %arg6[%c0_6, %c0_7] : memref<8x1xf32, #tpu.memory_space<vmem>>, vector<8x1xf32>
    tpu.vector_store %arg6[%c0_6, %c0_7], %4 {strides = array<i32>} : memref<8x1xf32, #tpu.memory_space<vmem>>, vector<8x1xf32>,
    %c0_8 = arith.constant 0 : index
    %c0_9 = arith.constant 0 : index
    %6 = vector.load %arg4[%c0_8, %c0_9] : memref<1x128xf32, #tpu.memory_space<vmem>>, vector<1x128xf32>
    %cst_10 = arith.constant dense<0.000000e+00> : vector<1x8xf32>
    %7 = tpu.matmul %6, %2, %cst_10 {dimension_numbers = #tpu.dot_dimension_numbers<[1], [1], [0], [0], [0, 0, 1, 0], [], []>} : vector<1x128xf32>, vector<8x128xf32>, vector<1x8xf32> -> vector<1x8xf32>
    %c0_11 = arith.constant 0 : index
    %c0_12 = arith.constant 0 : index
    %8 = vector.load %arg7[%c0_11, %c0_12] : memref<1x8xf32, #tpu.memory_space<vmem>>, vector<1x8xf32>
    tpu.vector_store %arg7[%c0_11, %c0_12], %7 {strides = array<i32>} : memref<1x8xf32, #tpu.memory_space<vmem>>, vector<1x8xf32>,
    %9 = arith.truncf %2 : vector<8x128xf32> to vector<8x128xbf16>
    %c0_13 = arith.constant 0 : index
    %c0_14 = arith.constant 0 : index
    %10 = vector.load %arg5[%c0_13, %c0_14] : memref<8x128xbf16, #tpu.memory_space<vmem>>, vector<8x128xbf16>
    tpu.vector_store %arg5[%c0_13, %c0_14], %9 {strides = array<i32>} : memref<8x128xbf16, #tpu.memory_space<vmem>>, vector<8x128xbf16>,
    return
  }
  func.func @transform_0(%arg0: i32) -> (i32, i32) {
    %c0_i32 = arith.constant 0 : i32
    %c0_i32_0 = arith.constant 0 : i32
    return %arg0, %c0_i32 : i32, i32
  }
  func.func @transform_1(%arg0: i32) -> (i32, i32) {
    %c0_i32 = arith.constant 0 : i32
    %c0_i32_0 = arith.constant 0 : i32
    %c0_i32_1 = arith.constant 0 : i32
    return %c0_i32, %c0_i32_0 : i32, i32
  }
  func.func @transform_2(%arg0: i32) -> (i32, i32) {
    %c0_i32 = arith.constant 0 : i32
    %c0_i32_0 = arith.constant 0 : i32
    %c0_i32_1 = arith.constant 0 : i32
    return %c0_i32, %c0_i32_0 : i32, i32
  }
  func.func @transform_3(%arg0: i32) -> (i32, i32) {
    %c0_i32 = arith.constant 0 : i32
    %c0_i32_0 = arith.constant 0 : i32
    %c0_i32_1 = arith.constant 0 : i32
    return %c0_i32, %c0_i32_0 : i32, i32
  }
  func.func @transform_4(%arg0: i32) -> (i32, i32) {
    %c0_i32 = arith.constant 0 : i32
    %c0_i32_0 = arith.constant 0 : i32
    return %arg0, %c0_i32 : i32, i32
  }
  func.func @transform_5(%arg0: i32) -> (i32, i32) {
    %c0_i32 = arith.constant 0 : i32
    %c0_i32_0 = arith.constant 0 : i32
    return %arg0, %c0_i32 : i32, i32
  }
  func.func @transform_6(%arg0: i32) -> (i32, i32) {
    %c0_i32 = arith.constant 0 : i32
    %c0_i32_0 = arith.constant 0 : i32
    return %c0_i32, %arg0 : i32, i32
  }
}

</mosaic_0001>

<llo_original>
// kernel: tpu_custom_call.1
$region0: #{tpu_custom_call.1}
  #allocation0 [shape = 'u32[]', space=smem, size = 0x4, offset = 0x4, fixed_abs, tag = 'smem constant byte address 0x4 - core index']
  #allocation1 [shape = 'u32[144,128]{1,0:T(1,128)}', space=vmem, size = 0x12000, scoped, tag = 'internal scratch']
  %s0 = inlined_call_operand.hbm [shape: bf16[8,16], index: 0, kind: input, shape index: {}]
  %s1 = inlined_call_operand.hbm [shape: bf16[16,128], index: 1, kind: input, shape index: {}]
  %s2 = inlined_call_operand.vmem [shape: f32[1,128], index: 2, kind: input, shape index: {}]
  %s3 = inlined_call_operand.vmem [shape: f32[1,128], index: 3, kind: input, shape index: {}]
  %s4 = inlined_call_operand.hbm [shape: bf16[8,128], index: 4, kind: output, shape index: {0}]
  %s5 = inlined_call_operand.vmem [shape: f32[8,1], index: 5, kind: output, shape index: {1}]
  %s6 = inlined_call_operand.hbm [shape: f32[1,8], index: 6, kind: output, shape index: {2}]
  %7 = xla_tuple %s4, %s5, %s6
  %s8 = sld [smem:[#allocation0]]
  $region50: #{tpu_custom_call.1} parent=0
    _
  %s10 = ssub.s32 1, %s8
  %s11 = scalar_select 0, %s10, %s8
  $region1: #{tpu_custom_call.1} parent=0
    #allocation2 [shape = 'u8[2048]{0}', space=vmem, size = 0x800, scoped, tag = 'input window, operand 0, single buffered']
    #allocation3 [shape = 's32[1]{0}', space=sflag, size = 0x4, scoped, tag = 'scoped memory for tpu_custom_call.1']
    #allocation4 [shape = 's32[1]{0}', space=sflag, size = 0x4, scoped, tag = 'scoped memory for tpu_custom_call.1']
    #allocation5 [shape = 'u8[4096]{0}', space=vmem, size = 0x1000, scoped, tag = 'input window, operand 1, single buffered']
    #allocation6 [shape = 's32[1]{0}', space=sflag, size = 0x4, scoped, tag = 'scoped memory for tpu_custom_call.1']
    #allocation7 [shape = 'u8[2048]{0}', space=vmem, size = 0x800, scoped, tag = 'output window, operand 0, single buffered']
    #allocation8 [shape = 'u8[512]{0}', space=vmem, size = 0x400, scoped, tag = 'output window, operand 2, single buffered']
    #allocation9 [shape = 's32[1]{0}', space=sflag, size = 0x4, scoped, tag = 'scoped memory for tpu_custom_call.1']
    %12 = vsyncpa [#allocation3], 0
    %13 = vsyncpa [#allocation6], 0
    %14 = vsyncpa [#allocation4], 0
    %15 = vsyncpa [#allocation9], 0
    // Predicated region
    $region2: #{tpu_custom_call.1} parent=1 // pred_check
      _
    $region3: #{tpu_custom_call.1} parent=1 // pred_check_branch
      %17 = sbr.rel (0) target = $region5
    $region4: #{tpu_custom_call.1} parent=1 // pred_region
      %s19 = ssub.s32 64, 64
      %20 = vsyncadd [#allocation3], %s19
      %s22 = sshll.u32 [#allocation2], 4
      %s23 = int_to_ptr.vmem [resolvable:$true] %s22
      %25 = dma.hbm_to_vmem [thread:$0]  %s0, 64, %s23, [#allocation3]
    $region5: #{tpu_custom_call.1} parent=1 // pred_fallthru
      _
    // Predicated region
    $region6: #{tpu_custom_call.1} parent=1 // pred_check
      _
    $region7: #{tpu_custom_call.1} parent=1 // pred_check_branch
      %27 = sbr.rel (0) target = $region9
    $region8: #{tpu_custom_call.1} parent=1 // pred_region
      %s29 = ssub.s32 128, 128
      %30 = vsyncadd [#allocation6], %s29
      %s31 = sshll.u32 [#allocation5], 4
      %s32 = int_to_ptr.vmem [resolvable:$true] %s31
      %37 = dma.hbm_to_vmem [thread:$0]  %s1, 128, %s32, [#allocation6], 64, 64, 4
    $region9: #{tpu_custom_call.1} parent=1 // pred_fallthru
      _
    // Predicated region
    $region10: #{tpu_custom_call.1} parent=1 // pred_check
      _
    $region11: #{tpu_custom_call.1} parent=1 // pred_check_branch
      %39 = sbr.rel (0) target = $region13
    $region12: #{tpu_custom_call.1} parent=1 // pred_region
      _
    $region13: #{tpu_custom_call.1} parent=1 // pred_fallthru
      _
    // Predicated region
    $region14: #{tpu_custom_call.1} parent=1 // pred_check
      _
    $region15: #{tpu_custom_call.1} parent=1 // pred_check_branch
      %41 = sbr.rel (0) target = $region17
    $region16: #{tpu_custom_call.1} parent=1 // pred_region
      _
    $region17: #{tpu_custom_call.1} parent=1 // pred_fallthru
      _
    // Predicated region
    $region18: #{tpu_custom_call.1} parent=1 // pred_check
      _
    $region19: #{tpu_custom_call.1} parent=1 // pred_check_branch
      %43 = sbr.rel (0) target = $region21
    $region20: #{tpu_custom_call.1} parent=1 // pred_region
      %44 = dma.done [#allocation3], 64
    $region21: #{tpu_custom_call.1} parent=1 // pred_fallthru
      _
    // Predicated region
    $region22: #{tpu_custom_call.1} parent=1 // pred_check
      _
    $region23: #{tpu_custom_call.1} parent=1 // pred_check_branch
      %46 = sbr.rel (0) target = $region25
    $region24: #{tpu_custom_call.1} parent=1 // pred_region
      %47 = dma.done [#allocation6], 128
    $region25: #{tpu_custom_call.1} parent=1 // pred_fallthru
      _
    %v49 = vld [vmem:[#allocation2] sm:$0xf]
    %v50 = vld [vmem:[#allocation5] sm:$0xf]
    %v51 = vld [vmem:[#allocation5 + $0x4] sm:$0xf]
    %v54 = vunpack.c.l.b16 %v50
    %v55 = vunpack.c.l.b16 %v51
    %v56 = vpack.c.b16 %v55, %v54
    %vm58 = vcmask 130048
    %v60 = vsel %vm58, %v49, 0
    %62 = vmatprep.subr.bf16.mxu0 0
    %63 = vmatpush1.bf16.msra.mxu0 %v56
    %64 = vmatprep.subr.bf16.mxu0 0
    %65 = vmatpush1.bf16.msra.mxu0 0
    %66 = vmatprep.subr.bf16.mxu0 0
    %67 = vmatpush1.bf16.msra.mxu0 0
    %68 = vmatprep.subr.bf16.mxu0 0
    %69 = vmatpush1.bf16.msra.mxu0 0
    %70 = vmatprep.subr.bf16.mxu0 0
    %71 = vmatpush1.bf16.msra.mxu0 0
    %72 = vmatprep.subr.bf16.mxu0 0
    %73 = vmatpush1.bf16.msra.mxu0 0
    %74 = vmatprep.subr.bf16.mxu0 0
    %75 = vmatpush1.bf16.msra.mxu0 0
    %76 = vmatprep.subr.bf16.mxu0 0
    %77 = vmatpush1.bf16.msra.mxu0 0
    %78 = vmatprep.subr.bf16.mxu0 0
    %79 = vmatpush1.bf16.msra.mxu0 0
    %80 = vmatprep.subr.bf16.mxu0 0
    %81 = vmatpush1.bf16.msra.mxu0 0
    %82 = vmatprep.subr.bf16.mxu0 0
    %83 = vmatpush1.bf16.msra.mxu0 0
    %84 = vmatprep.subr.bf16.mxu0 0
    %85 = vmatpush1.bf16.msra.mxu0 0
    %86 = vmatprep.subr.bf16.mxu0 0
    %87 = vmatpush1.bf16.msra.mxu0 0
    %88 = vmatprep.subr.bf16.mxu0 0
    %89 = vmatpush1.bf16.msra.mxu0 0
    %90 = vmatprep.subr.bf16.mxu0 0
    %91 = vmatpush1.bf16.msra.mxu0 0
    %92 = vmatprep.subr.bf16.mxu0 0
    %93 = vmatpush1.bf16.msra.mxu0 0
    %94 = vmatprep.mubr.bf16.mxu0 0
    %95 = vmatmul.mubr.bf16.gmra.mrb[0].mxu0 %v60
    %v96 = vpop.f32.mrb[0].mxu0
    %v97 = vadd.f32 0.0, %v96
    %v98 = vpop.f32.mrb[0].mxu0
    %v99 = vpop.f32.mrb[0].mxu0
    %v100 = vpop.f32.mrb[0].mxu0
    %101 = vdwg.mxu0
    %v102 = vld [vmem:[%s2] sm:$0x1]
    %v104 = vlaneseq
    %v105 = vshrl.u32 %v104, 7
    %v106 = vsub.s32 0, %v105
    %v107 = vrot.slane %v102, %v106
    %v109 = vmul.f32 %v97, %v107
    %110 = vadd.xlane.f32.xlu0 %v109
    %v111 = vpop.xlane.xlu0 %110
    %vm112 = vcmask 7168
    %113 = vst.msk [vmem:[%s5] sm:$0xff] %vm112, %v111
    %v114 = vld [vmem:[%s3] sm:$0x1]
    %115 = vmatprep.subr.mxu0 0.0
    %116 = vmatpush1.xpose.msra.mxu0 %v97
    %117 = vmatprep.subr.mxu0 0.0
    %118 = vmatpush1.xpose.msra.mxu0 0.0
    %119 = vmatprep.subr.mxu0 0.0
    %120 = vmatpush1.xpose.msra.mxu0 0.0
    %121 = vmatprep.subr.mxu0 0.0
    %122 = vmatpush1.xpose.msra.mxu0 0.0
    %123 = vmatprep.subr.mxu0 0.0
    %124 = vmatpush1.xpose.msra.mxu0 0.0
    %125 = vmatprep.subr.mxu0 0.0
    %126 = vmatpush1.xpose.msra.mxu0 0.0
    %127 = vmatprep.subr.mxu0 0.0
    %128 = vmatpush1.xpose.msra.mxu0 0.0
    %129 = vmatprep.subr.mxu0 0.0
    %130 = vmatpush1.xpose.msra.mxu0 0.0
    %131 = vmatprep.subr.mxu0 0.0
    %132 = vmatpush1.xpose.msra.mxu0 0.0
    %133 = vmatprep.subr.mxu0 0.0
    %134 = vmatpush1.xpose.msra.mxu0 0.0
    %135 = vmatprep.subr.mxu0 0.0
    %136 = vmatpush1.xpose.msra.mxu0 0.0
    %137 = vmatprep.subr.mxu0 0.0
    %138 = vmatpush1.xpose.msra.mxu0 0.0
    %139 = vmatprep.subr.mxu0 0.0
    %140 = vmatpush1.xpose.msra.mxu0 0.0
    %141 = vmatprep.subr.mxu0 0.0
    %142 = vmatpush1.xpose.msra.mxu0 0.0
    %143 = vmatprep.subr.mxu0 0.0
    %144 = vmatpush1.xpose.msra.mxu0 0.0
    %145 = vmatprep.subr.mxu0 0.0
    %146 = vmatpush1.xpose.msra.mxu0 0.0
    %147 = vmatprep.subr.mxu0 0.0
    %148 = vmatpush1.xpose.msra.mxu0 0.0
    %149 = vmatprep.subr.mxu0 0.0
    %150 = vmatpush1.xpose.msra.mxu0 0.0
    %151 = vmatprep.subr.mxu0 0.0
    %152 = vmatpush1.xpose.msra.mxu0 0.0
    %153 = vmatprep.subr.mxu0 0.0
    %154 = vmatpush1.xpose.msra.mxu0 0.0
    %155 = vmatprep.subr.mxu0 0.0
    %156 = vmatpush1.xpose.msra.mxu0 0.0
    %157 = vmatprep.subr.mxu0 0.0
    %158 = vmatpush1.xpose.msra.mxu0 0.0
    %159 = vmatprep.subr.mxu0 0.0
    %160 = vmatpush1.xpose.msra.mxu0 0.0
    %161 = vmatprep.subr.mxu0 0.0
    %162 = vmatpush1.xpose.msra.mxu0 0.0
    %163 = vmatprep.subr.mxu0 0.0
    %164 = vmatpush1.xpose.msra.mxu0 0.0
    %165 = vmatprep.subr.mxu0 0.0
    %166 = vmatpush1.xpose.msra.mxu0 0.0
    %167 = vmatprep.subr.mxu0 0.0
    %168 = vmatpush1.xpose.msra.mxu0 0.0
    %169 = vmatprep.subr.mxu0 0.0
    %170 = vmatpush1.xpose.msra.mxu0 0.0
    %171 = vmatprep.subr.mxu0 0.0
    %172 = vmatpush1.xpose.msra.mxu0 0.0
    %173 = vmatprep.subr.mxu0 0.0
    %174 = vmatpush1.xpose.msra.mxu0 0.0
    %175 = vmatprep.subr.mxu0 0.0
    %176 = vmatpush1.xpose.msra.mxu0 0.0
    %177 = vmatprep.subr.mxu0 0.0
    %178 = vmatpush1.xpose.msra.mxu0 0.0
    %179 = vmatprep.mubr.f32.mxu0 0.0
    %180 = vmatmul.mubr.f32.gmra.mrb[0].mxu0 %v114
    %v181 = vpop.f32.mrb[0].mxu0
    %v182 = vadd.f32 0.0, %v181
    %v183 = vpop.f32.mrb[0].mxu0
    %184 = vdwg.mxu0
    %vm185 = vcmask 57344
    %186 = vst.msk [vmem:[#allocation8] sm:$0x1] %vm185, %v182
    %v187 = vpack.c.bf16 %v97, %v97
    %188 = vst [vmem:[#allocation7] sm:$0xf] %v187
    // Predicated region
    $region26: #{tpu_custom_call.1} parent=1 // pred_check
      _
    $region27: #{tpu_custom_call.1} parent=1 // pred_check_branch
      %190 = sbr.rel (0) target = $region29
    $region28: #{tpu_custom_call.1} parent=1 // pred_region
      %s192 = ssub.s32 64, 64
      %193 = vsyncadd [#allocation4], %s192
      %s195 = sshll.u32 [#allocation7], 4
      %s196 = int_to_ptr.vmem [resolvable:$true] %s195
      %198 = dma.vmem_to_hbm [thread:$0]  %s196, 64, %s4, [#allocation4]
    $region29: #{tpu_custom_call.1} parent=1 // pred_fallthru
      _
    // Predicated region
    $region30: #{tpu_custom_call.1} parent=1 // pred_check
      _
    $region31: #{tpu_custom_call.1} parent=1 // pred_check_branch
      %200 = sbr.rel (0) target = $region33
    $region32: #{tpu_custom_call.1} parent=1 // pred_region
      _
    $region33: #{tpu_custom_call.1} parent=1 // pred_fallthru
      _
    // Predicated region
    $region34: #{tpu_custom_call.1} parent=1 // pred_check
      _
    $region35: #{tpu_custom_call.1} parent=1 // pred_check_branch
      %202 = sbr.rel (0) target = $region37
    $region36: #{tpu_custom_call.1} parent=1 // pred_region
      %s204 = ssub.s32 16, 16
      %205 = vsyncadd [#allocation9], %s204
      %s207 = sshll.u32 [#allocation8], 4
      %s208 = int_to_ptr.vmem [resolvable:$true] %s207
      %210 = dma.vmem_to_hbm [thread:$0]  %s208, 16, %s6, [#allocation9]
    $region37: #{tpu_custom_call.1} parent=1 // pred_fallthru
      _
    // Predicated region
    $region38: #{tpu_custom_call.1} parent=1 // pred_check
      _
    $region39: #{tpu_custom_call.1} parent=1 // pred_check_branch
      %212 = sbr.rel (0) target = $region41
    $region40: #{tpu_custom_call.1} parent=1 // pred_region
      %213 = dma.done [#allocation4], 64
    $region41: #{tpu_custom_call.1} parent=1 // pred_fallthru
      _
    // Predicated region
    $region42: #{tpu_custom_call.1} parent=1 // pred_check
      _
    $region43: #{tpu_custom_call.1} parent=1 // pred_check_branch
      %215 = sbr.rel (0) target = $region45
    $region44: #{tpu_custom_call.1} parent=1 // pred_region
      _
    $region45: #{tpu_custom_call.1} parent=1 // pred_fallthru
      _
    // Predicated region
    $region46: #{tpu_custom_call.1} parent=1 // pred_check
      _
    $region47: #{tpu_custom_call.1} parent=1 // pred_check_branch
      %217 = sbr.rel (0) target = $region49
    $region48: #{tpu_custom_call.1} parent=1 // pred_region
      %218 = dma.done [#allocation9], 16
    $region49: #{tpu_custom_call.1} parent=1 // pred_fallthru
      _
    %219 = vsyncpa [#allocation3], 1
    %220 = vsyncpa [#allocation6], 1
    %221 = vsyncpa [#allocation4], 1
    %222 = vsyncpa [#allocation9], 1

</llo_original>
